<compile_context>
chip_gen: v6e
topology: v6e:2x2x1
jax: 0.10.0
libtpu: 0.0.40
codegen_flags: <defaults>
</compile_context>

<pallas_src>
import jax
import jax.numpy as jnp
from jax import lax
from jax.experimental import pallas as pl
from jax.experimental.pallas import tpu as pltpu

# ---- model hyper-parameters (small, consistent with the forward pass) -------
B = 2             # batch
T = 8             # label sequence length
V = 16            # vocab size (encoder)
E = 32            # embedding dim
F = 64            # decoder feature dim
H = 16            # image height produced by the upsampler
UPW = 4           # width pixels emitted per token by the upsampler
W_IMG = T * UPW   # image width = 32
NUM_CLASSES = 16  # hwr output classes (log_softmax over this dim)


# ----------------------------- fused Pallas kernel ---------------------------
def _hw_generator_kernel(labels_ref, online_ref, emb_ref, w_dec_ref, b_dec_ref,
                         w_up_ref, b_up_ref, w_hwr_ref, w_on_ref, b_hwr_ref,
                         logp_ref, pat_ref):
    f32 = jnp.float32

    # --- encoder: embedding lookup as (in-register one-hot) @ table on the MXU
    lbl = labels_ref[...]                                           # (B*T, 1) int32
    class_iota = lax.broadcasted_iota(jnp.int32, (B * T, V), 1)     # (B*T, V)
    one_hot = jnp.where(class_iota == lbl, 1.0, 0.0).astype(f32)    # (B*T, V)
    emb = jnp.dot(one_hot, emb_ref[...], preferred_element_type=f32)  # (B*T, E)

    # --- decoder: Linear + ReLU
    feat = jnp.dot(emb, w_dec_ref[...], preferred_element_type=f32) + b_dec_ref[...]
    feat = jnp.maximum(feat, 0.0)                                   # (B*T, F)

    # --- upsampler: Linear + tanh.  Weight columns were pre-permuted to (u, h)
    #     order, so pat[(b,t), u*H + h] = image[b, h, t*UPW + u].
    pat = jnp.dot(feat, w_up_ref[...], preferred_element_type=f32) + b_up_ref[...]
    pat = jnp.tanh(pat)                                             # (B*T, UPW*H)
    pat_ref[...] = pat                                              # raw image pixels

    # --- hwr + log_softmax.  The `online` flag is folded into the bias:
    #     preds = cols @ w_hwr[:H] + (b_hwr + online * w_hwr[H])  (algebraically exact)
    online = online_ref[0]
    w_hwr = w_hwr_ref[...]                                          # (H, C)
    b_eff = b_hwr_ref[...] + online * w_on_ref[...]                 # (1, C)

    for u in range(UPW):  # static unroll; each u is a contiguous lane slice
        cols_u = pat[:, u * H:(u + 1) * H]                          # (B*T, H)
        preds = jnp.dot(cols_u, w_hwr, preferred_element_type=f32) + b_eff  # (B*T, C)
        # numerically-stable log_softmax over the class (lane) dim
        m = jnp.max(preds, axis=-1, keepdims=True)
        s = preds - m
        lse = jnp.log(jnp.sum(jnp.exp(s), axis=-1, keepdims=True))  # exp/log -> EUP
        logp_ref[u * (B * T):(u + 1) * (B * T), :] = s - lse


# --------------------------- parameter construction --------------------------
def init_params(key):
    ks = jax.random.split(key, 8)

    def u(k, shape, scale):
        return jax.random.uniform(k, shape, jnp.float32, -1.0, 1.0) * scale

    return {
        # encoder: embedding table
        "emb":   u(ks[0], (V, E), 0.1),
        # decoder: Linear(E -> F) + ReLU
        "w_dec": u(ks[1], (E, F), 0.1),
        "b_dec": u(ks[2], (F,), 0.01),
        # upsampler: Linear(F -> H*UPW) + tanh, column index = h*UPW + u
        "w_up":  u(ks[3], (F, H * UPW), 0.1),
        "b_up":  u(ks[4], (H * UPW,), 0.01),
        # hwr: per-column classifier over H pixels + 1 "online" feature
        "w_hwr": u(ks[5], (H + 1, NUM_CLASSES), 0.1),
        "b_hwr": u(ks[6], (NUM_CLASSES,), 0.01),
    }


def prepare_params(params):
    """One-time (outside jit) re-layout of the weights for the fused kernel."""
    # permute upsampler columns from (h, u) order to (u, h) order
    w_up2 = (params["w_up"].reshape(F, H, UPW).transpose(0, 2, 1)
             .reshape(F, UPW * H))
    b_up2 = (params["b_up"].reshape(H, UPW).transpose(1, 0)
             .reshape(1, UPW * H))
    return {
        "emb":      params["emb"],
        "w_dec":    params["w_dec"],
        "b_dec":    params["b_dec"].reshape(1, F),
        "w_up2":    w_up2,
        "b_up2":    b_up2,
        "w_hwr_h":  params["w_hwr"][:H],                    # (H, C)
        "w_hwr_on": params["w_hwr"][H:H + 1],               # (1, C) online-flag row
        "b_hwr":    params["b_hwr"].reshape(1, NUM_CLASSES),
    }


# ------------------------------- forward pass ---------------------------------
def hw_generator_forward(prepped, labels, online):
    """labels: (B, T) int32 ; online: scalar float (0./1.) flag for the hwr.

    Returns (log_softmax(preds, dim=1), images.permute(0, 2, 3, 1)) matching the
    torch HWGenerator.forward contract: shapes (B, C, W) and (B, H, W, 1).
    """
    labels2d = labels.reshape(B * T, 1).astype(jnp.int32)
    online1d = jnp.asarray(online, jnp.float32).reshape(1)

    logp_raw, pat = pl.pallas_call(
        _hw_generator_kernel,
        out_shape=(
            jax.ShapeDtypeStruct((UPW * B * T, NUM_CLASSES), jnp.float32),  # (u,b,t) rows
            jax.ShapeDtypeStruct((B * T, UPW * H), jnp.float32),            # raw patches
        ),
        grid=(1,),
        in_specs=[
            pl.BlockSpec((B * T, 1), lambda i: (0, 0)),                    # labels (VMEM)
            pl.BlockSpec(memory_space=pltpu.MemorySpace.SMEM),             # online scalar
            pl.BlockSpec((V, E), lambda i: (0, 0)),                        # emb
            pl.BlockSpec((E, F), lambda i: (0, 0)),                        # w_dec
            pl.BlockSpec((1, F), lambda i: (0, 0)),                        # b_dec
            pl.BlockSpec((F, UPW * H), lambda i: (0, 0)),                  # w_up (permuted)
            pl.BlockSpec((1, UPW * H), lambda i: (0, 0)),                  # b_up (permuted)
            pl.BlockSpec((H, NUM_CLASSES), lambda i: (0, 0)),              # w_hwr[:H]
            pl.BlockSpec((1, NUM_CLASSES), lambda i: (0, 0)),              # w_hwr[H]
            pl.BlockSpec((1, NUM_CLASSES), lambda i: (0, 0)),              # b_hwr
        ],
        out_specs=(
            pl.BlockSpec((UPW * B * T, NUM_CLASSES), lambda i: (0, 0)),
            pl.BlockSpec((B * T, UPW * H), lambda i: (0, 0)),
        ),
        compiler_params=pltpu.CompilerParams(dimension_semantics=("arbitrary",)),
    )(labels2d, online1d, prepped["emb"], prepped["w_dec"], prepped["b_dec"],
      prepped["w_up2"], prepped["b_up2"], prepped["w_hwr_h"], prepped["w_hwr_on"],
      prepped["b_hwr"])

    # tiny XLA fix-ups on KB-sized results (final permutes only):
    #   logp_raw[u*B*T + b*T + t, c]  ->  logp[b, c, t*UPW + u]
    logp = (logp_raw.reshape(UPW, B, T, NUM_CLASSES)
            .transpose(1, 3, 2, 0)
            .reshape(B, NUM_CLASSES, W_IMG))
    #   pat[b*T + t, u*H + h]         ->  images_nhwc[b, h, t*UPW + u, 0]
    images_nhwc = (pat.reshape(B, T, UPW, H)
                   .transpose(0, 3, 1, 2)
                   .reshape(B, H, W_IMG, 1))
    return logp, images_nhwc


# --------------------------- pure-JAX reference (check) -----------------------
def _reference_forward(params, labels, online):
    one_hot = jax.nn.one_hot(labels.reshape(-1), V, dtype=jnp.float32)
    emb = one_hot @ params["emb"]
    feat = jax.nn.relu(emb @ params["w_dec"] + params["b_dec"])
    patches = jnp.tanh(feat @ params["w_up"] + params["b_up"])
    images = (patches.reshape(B, T, H, UPW).transpose(0, 2, 1, 3)
              .reshape(B, 1, H, W_IMG))
    cols = images.reshape(B, H, W_IMG).transpose(0, 2, 1).reshape(B * W_IMG, H)
    online_feat = jnp.full((B * W_IMG, 1), online, jnp.float32)
    x_hwr = jnp.concatenate([cols, online_feat], axis=-1)
    preds = x_hwr @ params["w_hwr"] + params["b_hwr"]
    logp = jax.nn.log_softmax(preds, axis=-1)
    logp = logp.reshape(B, W_IMG, NUM_CLASSES).transpose(0, 2, 1)
    return logp, images.transpose(0, 2, 3, 1)


# ----------------------------------- main -------------------------------------
if __name__ == "__main__":
    key = jax.random.PRNGKey(0)
    pkey, lkey = jax.random.split(key)
    params = init_params(pkey)
    prepped = prepare_params(params)   # weight re-layout done once, outside jit

    labels = jax.random.randint(lkey, (B, T), 0, V, dtype=jnp.int32)
    online = jnp.float32(1.0)

    fwd = jax.jit(hw_generator_forward)
    log_probs, images_nhwc = fwd(prepped, labels, online)
    jax.block_until_ready(log_probs)
    jax.block_until_ready(images_nhwc)

    assert log_probs.shape == (B, NUM_CLASSES, W_IMG)
    assert images_nhwc.shape == (B, H, W_IMG, 1)
    # log_softmax sanity: probabilities over dim=1 sum to 1
    assert jnp.allclose(jnp.exp(log_probs).sum(axis=1), 1.0, atol=1e-5)

    # cross-check against a pure-JAX reference of the same synthetic forward
    # (loose tolerance: MXU vs XLA default f32 matmul precision may differ)
    ref_logp, ref_img = _reference_forward(params, labels, online)
    assert jnp.allclose(log_probs, ref_logp, atol=2e-2, rtol=2e-2)
    assert jnp.allclose(images_nhwc, ref_img, atol=1e-2, rtol=1e-2)

    print("KERNEL_OK")
</pallas_src>

<mosaic_0001>
module attributes {stable_mosaic.version = 11 : i64} {
  func.func @_hw_generator_kernel(%arg0: i32, %arg1: memref<16x1xi32, #tpu.memory_space<vmem>>, %arg2: memref<1xf32, #tpu.memory_space<smem>>, %arg3: memref<16x32xf32, #tpu.memory_space<vmem>>, %arg4: memref<32x64xf32, #tpu.memory_space<vmem>>, %arg5: memref<1x64xf32, #tpu.memory_space<vmem>>, %arg6: memref<64x64xf32, #tpu.memory_space<vmem>>, %arg7: memref<1x64xf32, #tpu.memory_space<vmem>>, %arg8: memref<16x16xf32, #tpu.memory_space<vmem>>, %arg9: memref<1x16xf32, #tpu.memory_space<vmem>>, %arg10: memref<1x16xf32, #tpu.memory_space<vmem>>, %arg11: memref<64x16xf32, #tpu.memory_space<vmem>>, %arg12: memref<16x64xf32, #tpu.memory_space<vmem>>) attributes {dimension_semantics = [#tpu.dimension_semantics<arbitrary>], iteration_bounds = array<i64: 1>, scalar_prefetch = 0 : i64, scratch_operands = 0 : i64, tpu.core_type = #tpu.core_type<tc>, window_params = [{pipeline_mode = #tpu.pipeline_mode<synchronous>, transform_indices = @transform_0, window_bounds = array<i64: 16, 1>}, {transform_indices = @transform_1, window_bounds = array<i64: 1>}, {pipeline_mode = #tpu.pipeline_mode<synchronous>, transform_indices = @transform_2, window_bounds = array<i64: 16, 32>}, {pipeline_mode = #tpu.pipeline_mode<synchronous>, transform_indices = @transform_3, window_bounds = array<i64: 32, 64>}, {pipeline_mode = #tpu.pipeline_mode<synchronous>, transform_indices = @transform_4, window_bounds = array<i64: 1, 64>}, {pipeline_mode = #tpu.pipeline_mode<synchronous>, transform_indices = @transform_5, window_bounds = array<i64: 64, 64>}, {pipeline_mode = #tpu.pipeline_mode<synchronous>, transform_indices = @transform_6, window_bounds = array<i64: 1, 64>}, {pipeline_mode = #tpu.pipeline_mode<synchronous>, transform_indices = @transform_7, window_bounds = array<i64: 16, 16>}, {pipeline_mode = #tpu.pipeline_mode<synchronous>, transform_indices = @transform_8, window_bounds = array<i64: 1, 16>}, {pipeline_mode = #tpu.pipeline_mode<synchronous>, transform_indices = @transform_9, window_bounds = array<i64: 1, 16>}, {pipeline_mode = #tpu.pipeline_mode<synchronous>, transform_indices = @transform_10, window_bounds = array<i64: 64, 16>}, {pipeline_mode = #tpu.pipeline_mode<synchronous>, transform_indices = @transform_11, window_bounds = array<i64: 16, 64>}]} {
    %c0 = arith.constant 0 : index
    %c0_0 = arith.constant 0 : index
    %0 = vector.load %arg1[%c0, %c0_0] : memref<16x1xi32, #tpu.memory_space<vmem>>, vector<16x1xi32>
    %1 = tpu.iota {dimensions = array<i32: 1>} : vector<16x16xi32>
    %2 = vector.broadcast %0 : vector<16x1xi32> to vector<16x16xi32>
    %3 = arith.cmpi eq, %1, %2 : vector<16x16xi32>
    %cst = arith.constant 1.000000e+00 : f32
    %cst_1 = arith.constant 0.000000e+00 : f32
    %4 = vector.broadcast %cst : f32 to vector<16x16xf32>
    %5 = vector.broadcast %cst_1 : f32 to vector<16x16xf32>
    %6 = arith.select %3, %4, %5 : vector<16x16xi1>, vector<16x16xf32>
    %c0_2 = arith.constant 0 : index
    %c0_3 = arith.constant 0 : index
    %7 = vector.load %arg3[%c0_2, %c0_3] : memref<16x32xf32, #tpu.memory_space<vmem>>, vector<16x32xf32>
    %cst_4 = arith.constant dense<0.000000e+00> : vector<16x32xf32>
    %8 = tpu.matmul %6, %7, %cst_4 {dimension_numbers = #tpu.dot_dimension_numbers<[1], [0], [0], [1], [0, 0, 1, 1], [], []>} : vector<16x16xf32>, vector<16x32xf32>, vector<16x32xf32> -> vector<16x32xf32>
    %c0_5 = arith.constant 0 : index
    %c0_6 = arith.constant 0 : index
    %9 = vector.load %arg4[%c0_5, %c0_6] : memref<32x64xf32, #tpu.memory_space<vmem>>, vector<32x64xf32>
    %cst_7 = arith.constant dense<0.000000e+00> : vector<16x64xf32>
    %10 = tpu.matmul %8, %9, %cst_7 {dimension_numbers = #tpu.dot_dimension_numbers<[1], [0], [0], [1], [0, 0, 1, 1], [], []>} : vector<16x32xf32>, vector<32x64xf32>, vector<16x64xf32> -> vector<16x64xf32>
    %c0_8 = arith.constant 0 : index
    %c0_9 = arith.constant 0 : index
    %11 = vector.load %arg5[%c0_8, %c0_9] : memref<1x64xf32, #tpu.memory_space<vmem>>, vector<1x64xf32>
    %12 = vector.broadcast %11 : vector<1x64xf32> to vector<16x64xf32>
    %13 = arith.addf %10, %12 : vector<16x64xf32>
    %cst_10 = arith.constant 0.000000e+00 : f32
    %14 = vector.broadcast %cst_10 : f32 to vector<16x64xf32>
    %15 = arith.maximumf %13, %14 : vector<16x64xf32>
    %c0_11 = arith.constant 0 : index
    %c0_12 = arith.constant 0 : index
    %16 = vector.load %arg6[%c0_11, %c0_12] : memref<64x64xf32, #tpu.memory_space<vmem>>, vector<64x64xf32>
    %cst_13 = arith.constant dense<0.000000e+00> : vector<16x64xf32>
    %17 = tpu.matmul %15, %16, %cst_13 {dimension_numbers = #tpu.dot_dimension_numbers<[1], [0], [0], [1], [0, 0, 1, 1], [], []>} : vector<16x64xf32>, vector<64x64xf32>, vector<16x64xf32> -> vector<16x64xf32>
    %c0_14 = arith.constant 0 : index
    %c0_15 = arith.constant 0 : index
    %18 = vector.load %arg7[%c0_14, %c0_15] : memref<1x64xf32, #tpu.memory_space<vmem>>, vector<1x64xf32>
    %19 = vector.broadcast %18 : vector<1x64xf32> to vector<16x64xf32>
    %20 = arith.addf %17, %19 : vector<16x64xf32>
    %21 = math.tanh %20 : vector<16x64xf32>
    %c0_16 = arith.constant 0 : index
    %c0_17 = arith.constant 0 : index
    %22 = vector.load %arg12[%c0_16, %c0_17] : memref<16x64xf32, #tpu.memory_space<vmem>>, vector<16x64xf32>
    tpu.vector_store %arg12[%c0_16, %c0_17], %21 {strides = array<i32>} : memref<16x64xf32, #tpu.memory_space<vmem>>, vector<16x64xf32>,
    %c0_18 = arith.constant 0 : index
    %23 = memref.load %arg2[%c0_18] : memref<1xf32, #tpu.memory_space<smem>>
    %c0_19 = arith.constant 0 : index
    %c0_20 = arith.constant 0 : index
    %24 = vector.load %arg8[%c0_19, %c0_20] : memref<16x16xf32, #tpu.memory_space<vmem>>, vector<16x16xf32>
    %c0_21 = arith.constant 0 : index
    %c0_22 = arith.constant 0 : index
    %25 = vector.load %arg10[%c0_21, %c0_22] : memref<1x16xf32, #tpu.memory_space<vmem>>, vector<1x16xf32>
    %c0_23 = arith.constant 0 : index
    %c0_24 = arith.constant 0 : index
    %26 = vector.load %arg9[%c0_23, %c0_24] : memref<1x16xf32, #tpu.memory_space<vmem>>, vector<1x16xf32>
    %27 = vector.broadcast %23 : f32 to vector<1x16xf32>
    %28 = arith.mulf %27, %26 : vector<1x16xf32>
    %29 = arith.addf %25, %28 : vector<1x16xf32>
    %30 = vector.extract_strided_slice %21 {offsets = [0, 0], sizes = [16, 16], strides = [1, 1]} : vector<16x64xf32> to vector<16x16xf32>
    %cst_25 = arith.constant dense<0.000000e+00> : vector<16x16xf32>
    %31 = tpu.matmul %30, %24, %cst_25 {dimension_numbers = #tpu.dot_dimension_numbers<[1], [0], [0], [1], [0, 0, 1, 1], [], []>} : vector<16x16xf32>, vector<16x16xf32>, vector<16x16xf32> -> vector<16x16xf32>
    %32 = vector.broadcast %29 : vector<1x16xf32> to vector<16x16xf32>
    %33 = arith.addf %31, %32 : vector<16x16xf32>
    %cst_26 = arith.constant dense<0xFF800000> : vector<16xf32>
    %34 = vector.multi_reduction <maximumf>, %33, %cst_26 [1] : vector<16x16xf32> to vector<16xf32>
    %35 = vector.shape_cast %34 : vector<16xf32> to vector<16x1xf32>
    %36 = vector.broadcast %35 : vector<16x1xf32> to vector<16x16xf32>
    %37 = arith.subf %33, %36 : vector<16x16xf32>
    %38 = math.exp %37 : vector<16x16xf32>
    %cst_27 = arith.constant dense<0.000000e+00> : vector<16xf32>
    %39 = vector.multi_reduction <add>, %38, %cst_27 [1] : vector<16x16xf32> to vector<16xf32>
    %40 = vector.shape_cast %39 : vector<16xf32> to vector<16x1xf32>
    %41 = math.log %40 : vector<16x1xf32>
    %42 = vector.broadcast %41 : vector<16x1xf32> to vector<16x16xf32>
    %43 = arith.subf %37, %42 : vector<16x16xf32>
    %c0_28 = arith.constant 0 : index
    %c0_29 = arith.constant 0 : index
    %44 = vector.load %arg11[%c0_28, %c0_29] : memref<64x16xf32, #tpu.memory_space<vmem>>, vector<16x16xf32>
    tpu.vector_store %arg11[%c0_28, %c0_29], %43 {strides = array<i32>} : memref<64x16xf32, #tpu.memory_space<vmem>>, vector<16x16xf32>,
    %45 = vector.extract_strided_slice %21 {offsets = [0, 16], sizes = [16, 16], strides = [1, 1]} : vector<16x64xf32> to vector<16x16xf32>
    %cst_30 = arith.constant dense<0.000000e+00> : vector<16x16xf32>
    %46 = tpu.matmul %45, %24, %cst_30 {dimension_numbers = #tpu.dot_dimension_numbers<[1], [0], [0], [1], [0, 0, 1, 1], [], []>} : vector<16x16xf32>, vector<16x16xf32>, vector<16x16xf32> -> vector<16x16xf32>
    %47 = vector.broadcast %29 : vector<1x16xf32> to vector<16x16xf32>
    %48 = arith.addf %46, %47 : vector<16x16xf32>
    %cst_31 = arith.constant dense<0xFF800000> : vector<16xf32>
    %49 = vector.multi_reduction <maximumf>, %48, %cst_31 [1] : vector<16x16xf32> to vector<16xf32>
    %50 = vector.shape_cast %49 : vector<16xf32> to vector<16x1xf32>
    %51 = vector.broadcast %50 : vector<16x1xf32> to vector<16x16xf32>
    %52 = arith.subf %48, %51 : vector<16x16xf32>
    %53 = math.exp %52 : vector<16x16xf32>
    %cst_32 = arith.constant dense<0.000000e+00> : vector<16xf32>
    %54 = vector.multi_reduction <add>, %53, %cst_32 [1] : vector<16x16xf32> to vector<16xf32>
    %55 = vector.shape_cast %54 : vector<16xf32> to vector<16x1xf32>
    %56 = math.log %55 : vector<16x1xf32>
    %57 = vector.broadcast %56 : vector<16x1xf32> to vector<16x16xf32>
    %58 = arith.subf %52, %57 : vector<16x16xf32>
    %c16 = arith.constant 16 : index
    %c0_33 = arith.constant 0 : index
    %59 = vector.load %arg11[%c16, %c0_33] : memref<64x16xf32, #tpu.memory_space<vmem>>, vector<16x16xf32>
    tpu.vector_store %arg11[%c16, %c0_33], %58 {strides = array<i32>} : memref<64x16xf32, #tpu.memory_space<vmem>>, vector<16x16xf32>,
    %60 = vector.extract_strided_slice %21 {offsets = [0, 32], sizes = [16, 16], strides = [1, 1]} : vector<16x64xf32> to vector<16x16xf32>
    %cst_34 = arith.constant dense<0.000000e+00> : vector<16x16xf32>
    %61 = tpu.matmul %60, %24, %cst_34 {dimension_numbers = #tpu.dot_dimension_numbers<[1], [0], [0], [1], [0, 0, 1, 1], [], []>} : vector<16x16xf32>, vector<16x16xf32>, vector<16x16xf32> -> vector<16x16xf32>
    %62 = vector.broadcast %29 : vector<1x16xf32> to vector<16x16xf32>
    %63 = arith.addf %61, %62 : vector<16x16xf32>
    %cst_35 = arith.constant dense<0xFF800000> : vector<16xf32>
    %64 = vector.multi_reduction <maximumf>, %63, %cst_35 [1] : vector<16x16xf32> to vector<16xf32>
    %65 = vector.shape_cast %64 : vector<16xf32> to vector<16x1xf32>
    %66 = vector.broadcast %65 : vector<16x1xf32> to vector<16x16xf32>
    %67 = arith.subf %63, %66 : vector<16x16xf32>
    %68 = math.exp %67 : vector<16x16xf32>
    %cst_36 = arith.constant dense<0.000000e+00> : vector<16xf32>
    %69 = vector.multi_reduction <add>, %68, %cst_36 [1] : vector<16x16xf32> to vector<16xf32>
    %70 = vector.shape_cast %69 : vector<16xf32> to vector<16x1xf32>
    %71 = math.log %70 : vector<16x1xf32>
    %72 = vector.broadcast %71 : vector<16x1xf32> to vector<16x16xf32>
    %73 = arith.subf %67, %72 : vector<16x16xf32>
    %c32 = arith.constant 32 : index
    %c0_37 = arith.constant 0 : index
    %74 = vector.load %arg11[%c32, %c0_37] : memref<64x16xf32, #tpu.memory_space<vmem>>, vector<16x16xf32>
    tpu.vector_store %arg11[%c32, %c0_37], %73 {strides = array<i32>} : memref<64x16xf32, #tpu.memory_space<vmem>>, vector<16x16xf32>,
    %75 = vector.extract_strided_slice %21 {offsets = [0, 48], sizes = [16, 16], strides = [1, 1]} : vector<16x64xf32> to vector<16x16xf32>
    %cst_38 = arith.constant dense<0.000000e+00> : vector<16x16xf32>
    %76 = tpu.matmul %75, %24, %cst_38 {dimension_numbers = #tpu.dot_dimension_numbers<[1], [0], [0], [1], [0, 0, 1, 1], [], []>} : vector<16x16xf32>, vector<16x16xf32>, vector<16x16xf32> -> vector<16x16xf32>
    %77 = vector.broadcast %29 : vector<1x16xf32> to vector<16x16xf32>
    %78 = arith.addf %76, %77 : vector<16x16xf32>
    %cst_39 = arith.constant dense<0xFF800000> : vector<16xf32>
    %79 = vector.multi_reduction <maximumf>, %78, %cst_39 [1] : vector<16x16xf32> to vector<16xf32>
    %80 = vector.shape_cast %79 : vector<16xf32> to vector<16x1xf32>
    %81 = vector.broadcast %80 : vector<16x1xf32> to vector<16x16xf32>
    %82 = arith.subf %78, %81 : vector<16x16xf32>
    %83 = math.exp %82 : vector<16x16xf32>
    %cst_40 = arith.constant dense<0.000000e+00> : vector<16xf32>
    %84 = vector.multi_reduction <add>, %83, %cst_40 [1] : vector<16x16xf32> to vector<16xf32>
    %85 = vector.shape_cast %84 : vector<16xf32> to vector<16x1xf32>
    %86 = math.log %85 : vector<16x1xf32>
    %87 = vector.broadcast %86 : vector<16x1xf32> to vector<16x16xf32>
    %88 = arith.subf %82, %87 : vector<16x16xf32>
    %c48 = arith.constant 48 : index
    %c0_41 = arith.constant 0 : index
    %89 = vector.load %arg11[%c48, %c0_41] : memref<64x16xf32, #tpu.memory_space<vmem>>, vector<16x16xf32>
    tpu.vector_store %arg11[%c48, %c0_41], %88 {strides = array<i32>} : memref<64x16xf32, #tpu.memory_space<vmem>>, vector<16x16xf32>,
    return
  }
  func.func @transform_0(%arg0: i32) -> (i32, i32) {
    %c0_i32 = arith.constant 0 : i32
    %c0_i32_0 = arith.constant 0 : i32
    %c0_i32_1 = arith.constant 0 : i32
    return %c0_i32, %c0_i32_0 : i32, i32
  }
  func.func @transform_1(%arg0: i32) -> i32 {
    %c0_i32 = arith.constant 0 : i32
    %c0_i32_0 = arith.constant 0 : i32
    return %c0_i32 : i32
  }
  func.func @transform_2(%arg0: i32) -> (i32, i32) {
    %c0_i32 = arith.constant 0 : i32
    %c0_i32_0 = arith.constant 0 : i32
    %c0_i32_1 = arith.constant 0 : i32
    return %c0_i32, %c0_i32_0 : i32, i32
  }
  func.func @transform_3(%arg0: i32) -> (i32, i32) {
    %c0_i32 = arith.constant 0 : i32
    %c0_i32_0 = arith.constant 0 : i32
    %c0_i32_1 = arith.constant 0 : i32
    return %c0_i32, %c0_i32_0 : i32, i32
  }
  func.func @transform_4(%arg0: i32) -> (i32, i32) {
    %c0_i32 = arith.constant 0 : i32
    %c0_i32_0 = arith.constant 0 : i32
    %c0_i32_1 = arith.constant 0 : i32
    return %c0_i32, %c0_i32_0 : i32, i32
  }
  func.func @transform_5(%arg0: i32) -> (i32, i32) {
    %c0_i32 = arith.constant 0 : i32
    %c0_i32_0 = arith.constant 0 : i32
    %c0_i32_1 = arith.constant 0 : i32
    return %c0_i32, %c0_i32_0 : i32, i32
  }
  func.func @transform_6(%arg0: i32) -> (i32, i32) {
    %c0_i32 = arith.constant 0 : i32
    %c0_i32_0 = arith.constant 0 : i32
    %c0_i32_1 = arith.constant 0 : i32
    return %c0_i32, %c0_i32_0 : i32, i32
  }
  func.func @transform_7(%arg0: i32) -> (i32, i32) {
    %c0_i32 = arith.constant 0 : i32
    %c0_i32_0 = arith.constant 0 : i32
    %c0_i32_1 = arith.constant 0 : i32
    return %c0_i32, %c0_i32_0 : i32, i32
  }
  func.func @transform_8(%arg0: i32) -> (i32, i32) {
    %c0_i32 = arith.constant 0 : i32
    %c0_i32_0 = arith.constant 0 : i32
    %c0_i32_1 = arith.constant 0 : i32
    return %c0_i32, %c0_i32_0 : i32, i32
  }
  func.func @transform_9(%arg0: i32) -> (i32, i32) {
    %c0_i32 = arith.constant 0 : i32
    %c0_i32_0 = arith.constant 0 : i32
    %c0_i32_1 = arith.constant 0 : i32
    return %c0_i32, %c0_i32_0 : i32, i32
  }
  func.func @transform_10(%arg0: i32) -> (i32, i32) {
    %c0_i32 = arith.constant 0 : i32
    %c0_i32_0 = arith.constant 0 : i32
    %c0_i32_1 = arith.constant 0 : i32
    return %c0_i32, %c0_i32_0 : i32, i32
  }
  func.func @transform_11(%arg0: i32) -> (i32, i32) {
    %c0_i32 = arith.constant 0 : i32
    %c0_i32_0 = arith.constant 0 : i32
    %c0_i32_1 = arith.constant 0 : i32
    return %c0_i32, %c0_i32_0 : i32, i32
  }
}

</mosaic_0001>

<llo_original>
// kernel: hw_generator_forward.1
$region0: #{hw_generator_forward.1}
  #allocation0 [shape = 'u32[]', space=smem, size = 0x4, offset = 0x4, fixed_abs, tag = 'smem constant byte address 0x4 - core index']
  #allocation1 [shape = 'u32[144,128]{1,0:T(1,128)}', space=vmem, size = 0x12000, scoped, tag = 'internal scratch']
  #allocation2 [shape = 'f32[1]{0:T(128)S(6)}', space=smem, size = 0x200, scoped, tag = 'scoped memory for hw_generator_forward.1']
  %s0 = inlined_call_operand.vmem [shape: s32[16,1], index: 0, kind: input, shape index: {}]
  %s1 = inlined_call_operand.<no memory space> [shape: f32[1], index: 1, kind: input, shape index: {}]
  %s2 = inlined_call_operand.vmem [shape: f32[16,32], index: 2, kind: input, shape index: {}]
  %s3 = inlined_call_operand.hbm [shape: f32[32,64], index: 3, kind: input, shape index: {}]
  %s4 = inlined_call_operand.vmem [shape: f32[1,64], index: 4, kind: input, shape index: {}]
  %s5 = inlined_call_operand.hbm [shape: f32[64,64], index: 5, kind: input, shape index: {}]
  %s6 = inlined_call_operand.vmem [shape: f32[1,64], index: 6, kind: input, shape index: {}]
  %s7 = inlined_call_operand.hbm [shape: f32[16,16], index: 7, kind: input, shape index: {}]
  %s8 = inlined_call_operand.vmem [shape: f32[1,16], index: 8, kind: input, shape index: {}]
  %s9 = inlined_call_operand.vmem [shape: f32[1,16], index: 9, kind: input, shape index: {}]
  %s10 = inlined_call_operand.vmem [shape: f32[64,16], index: 10, kind: output, shape index: {0}]
  %s11 = inlined_call_operand.vmem [shape: f32[16,64], index: 11, kind: output, shape index: {1}]
  %12 = xla_tuple %s10, %s11
  %s13 = sld [smem:[#allocation0]]
  $region70: #{hw_generator_forward.1} parent=0
    _
  %s15 = ssub.s32 1, %s13
  %s16 = scalar_select 0, %s15, %s13
  %17 = sst [smem:[#allocation2]] %s1
  $region1: #{hw_generator_forward.1} parent=0
    #allocation3 [shape = 'u8[16384]{0}', space=vmem, size = 0x4000, scoped, tag = 'input window, operand 3, single buffered']
    #allocation4 [shape = 's32[1]{0}', space=sflag, size = 0x4, scoped, tag = 'scoped memory for hw_generator_forward.1']
    #allocation5 [shape = 'u8[32768]{0}', space=vmem, size = 0x8000, scoped, tag = 'input window, operand 5, single buffered']
    #allocation6 [shape = 's32[1]{0}', space=sflag, size = 0x4, scoped, tag = 'scoped memory for hw_generator_forward.1']
    #allocation7 [shape = 'u8[8192]{0}', space=vmem, size = 0x2000, scoped, tag = 'input window, operand 7, single buffered']
    %18 = vsyncpa [#allocation4], 0
    %19 = vsyncpa [#allocation6], 0
    // Predicated region
    $region2: #{hw_generator_forward.1} parent=1 // pred_check
      _
    $region3: #{hw_generator_forward.1} parent=1 // pred_check_branch
      %21 = sbr.rel (0) target = $region5
    $region4: #{hw_generator_forward.1} parent=1 // pred_region
      _
    $region5: #{hw_generator_forward.1} parent=1 // pred_fallthru
      _
    // Predicated region
    $region6: #{hw_generator_forward.1} parent=1 // pred_check
      _
    $region7: #{hw_generator_forward.1} parent=1 // pred_check_branch
      %23 = sbr.rel (0) target = $region9
    $region8: #{hw_generator_forward.1} parent=1 // pred_region
      _
    $region9: #{hw_generator_forward.1} parent=1 // pred_fallthru
      _
    // Predicated region
    $region10: #{hw_generator_forward.1} parent=1 // pred_check
      _
    $region11: #{hw_generator_forward.1} parent=1 // pred_check_branch
      %25 = sbr.rel (0) target = $region13
    $region12: #{hw_generator_forward.1} parent=1 // pred_region
      _
    $region13: #{hw_generator_forward.1} parent=1 // pred_fallthru
      _
    // Predicated region
    $region14: #{hw_generator_forward.1} parent=1 // pred_check
      _
    $region15: #{hw_generator_forward.1} parent=1 // pred_check_branch
      %27 = sbr.rel (0) target = $region17
    $region16: #{hw_generator_forward.1} parent=1 // pred_region
      %s29 = ssub.s32 512, 512
      %30 = vsyncadd [#allocation4], %s29
      %s31 = sshll.u32 [#allocation3], 4
      %s32 = int_to_ptr.vmem [resolvable:$true] %s31
      %37 = dma.hbm_to_vmem [thread:$0]  %s3, 512, %s32, [#allocation4], 128, 128, 8
    $region17: #{hw_generator_forward.1} parent=1 // pred_fallthru
      _
    // Predicated region
    $region18: #{hw_generator_forward.1} parent=1 // pred_check
      _
    $region19: #{hw_generator_forward.1} parent=1 // pred_check_branch
      %39 = sbr.rel (0) target = $region21
    $region20: #{hw_generator_forward.1} parent=1 // pred_region
      _
    $region21: #{hw_generator_forward.1} parent=1 // pred_fallthru
      _
    // Predicated region
    $region22: #{hw_generator_forward.1} parent=1 // pred_check
      _
    $region23: #{hw_generator_forward.1} parent=1 // pred_check_branch
      %41 = sbr.rel (0) target = $region25
    $region24: #{hw_generator_forward.1} parent=1 // pred_region
      %s43 = ssub.s32 1024, 1024
      %44 = vsyncadd [#allocation6], %s43
      %s45 = sshll.u32 [#allocation5], 4
      %s46 = int_to_ptr.vmem [resolvable:$true] %s45
      %51 = dma.hbm_to_vmem [thread:$0]  %s5, 1024, %s46, [#allocation6], 128, 128, 8
    $region25: #{hw_generator_forward.1} parent=1 // pred_fallthru
      _
    // Predicated region
    $region26: #{hw_generator_forward.1} parent=1 // pred_check
      _
    $region27: #{hw_generator_forward.1} parent=1 // pred_check_branch
      %53 = sbr.rel (0) target = $region29
    $region28: #{hw_generator_forward.1} parent=1 // pred_region
      _
    $region29: #{hw_generator_forward.1} parent=1 // pred_fallthru
      _
    // Predicated region
    $region30: #{hw_generator_forward.1} parent=1 // pred_check
      _
    $region31: #{hw_generator_forward.1} parent=1 // pred_check_branch
      %55 = sbr.rel (0) target = $region33
    $region32: #{hw_generator_forward.1} parent=1 // pred_region
      %s57 = ssub.s32 256, 256
      %58 = vsyncadd [#allocation6], %s57
      %s59 = sshll.u32 [#allocation7], 4
      %s60 = int_to_ptr.vmem [resolvable:$true] %s59
      %65 = dma.hbm_to_vmem [thread:$0]  %s7, 256, %s60, [#allocation6], 128, 128, 8
    $region33: #{hw_generator_forward.1} parent=1 // pred_fallthru
      _
    // Predicated region
    $region34: #{hw_generator_forward.1} parent=1 // pred_check
      _
    $region35: #{hw_generator_forward.1} parent=1 // pred_check_branch
      %67 = sbr.rel (0) target = $region37
    $region36: #{hw_generator_forward.1} parent=1 // pred_region
      _
    $region37: #{hw_generator_forward.1} parent=1 // pred_fallthru
      _
    // Predicated region
    $region38: #{hw_generator_forward.1} parent=1 // pred_check
      _
    $region39: #{hw_generator_forward.1} parent=1 // pred_check_branch
      %69 = sbr.rel (0) target = $region41
    $region40: #{hw_generator_forward.1} parent=1 // pred_region
      _
    $region41: #{hw_generator_forward.1} parent=1 // pred_fallthru
      _
    // Predicated region
    $region42: #{hw_generator_forward.1} parent=1 // pred_check
      _
    $region43: #{hw_generator_forward.1} parent=1 // pred_check_branch
      %71 = sbr.rel (0) target = $region45
    $region44: #{hw_generator_forward.1} parent=1 // pred_region
      %72 = dma.done [#allocation4], 512
    $region45: #{hw_generator_forward.1} parent=1 // pred_fallthru
      _
    // Predicated region
    $region46: #{hw_generator_forward.1} parent=1 // pred_check
      _
    $region47: #{hw_generator_forward.1} parent=1 // pred_check_branch
      %74 = sbr.rel (0) target = $region49
    $region48: #{hw_generator_forward.1} parent=1 // pred_region
      %75 = dma.done [#allocation6], 1024
    $region49: #{hw_generator_forward.1} parent=1 // pred_fallthru
      _
    // Predicated region
    $region50: #{hw_generator_forward.1} parent=1 // pred_check
      _
    $region51: #{hw_generator_forward.1} parent=1 // pred_check_branch
      %77 = sbr.rel (0) target = $region53
    $region52: #{hw_generator_forward.1} parent=1 // pred_region
      %78 = dma.done [#allocation6], 256
    $region53: #{hw_generator_forward.1} parent=1 // pred_fallthru
      _
    %v79 = vld [vmem:[%s0] sm:$0xff]
    %v80 = vld [vmem:[%s0 + $0x8] sm:$0xff]
    %v81 = vlaneseq
    %v82 = vand.u32 %v81, 127
    %83 = vset.pattern.permute.xlu0 0
    %84 = vperm.xlu0 %83, %v79
    %v85 = vpop.permute.xlu0 %84
    %86 = vset.pattern.permute.xlu0 0
    %87 = vperm.xlu0 %86, %v80
    %v88 = vpop.permute.xlu0 %87
    %vm89 = vcmp.eq.s32.totalorder %v82, %v85
    %vm90 = vcmp.eq.s32.totalorder %v82, %v88
    %v91 = vsel %vm89, 1.0, 0.0
    %v92 = vsel %vm90, 1.0, 0.0
    %v93 = vld [vmem:[%s2] sm:$0xff]
    %v94 = vld [vmem:[%s2 + $0x8] sm:$0xff]
    %vm95 = vcmask 130048
    %v97 = vsel %vm95, %v91, 0
    %v100 = vsel %vm95, %v92, 0
    %102 = vmatprep.subr.mxu0 0.0
    %103 = vmatpush1.msra.mxu0 0.0
    %104 = vmatprep.subr.mxu0 0.0
    %105 = vmatpush1.msra.mxu0 0.0
    %106 = vmatprep.subr.mxu0 0.0
    %107 = vmatpush1.msra.mxu0 0.0
    %108 = vmatprep.subr.mxu0 0.0
    %109 = vmatpush1.msra.mxu0 0.0
    %110 = vmatprep.subr.mxu0 0.0
    %111 = vmatpush1.msra.mxu0 0.0
    %112 = vmatprep.subr.mxu0 0.0
    %113 = vmatpush1.msra.mxu0 0.0
    %114 = vmatprep.subr.mxu0 0.0
    %115 = vmatpush1.msra.mxu0 0.0
    %116 = vmatprep.subr.mxu0 0.0
    %117 = vmatpush1.msra.mxu0 0.0
    %118 = vmatprep.subr.mxu0 0.0
    %119 = vmatpush1.msra.mxu0 0.0
    %120 = vmatprep.subr.mxu0 0.0
    %121 = vmatpush1.msra.mxu0 0.0
    %122 = vmatprep.subr.mxu0 0.0
    %123 = vmatpush1.msra.mxu0 0.0
    %124 = vmatprep.subr.mxu0 0.0
    %125 = vmatpush1.msra.mxu0 0.0
    %126 = vmatprep.subr.mxu0 0.0
    %127 = vmatpush1.msra.mxu0 0.0
    %128 = vmatprep.subr.mxu0 0.0
    %129 = vmatpush1.msra.mxu0 0.0
    %130 = vmatprep.subr.mxu0 0.0
    %131 = vmatpush1.msra.mxu0 %v94
    %132 = vmatprep.subr.mxu0 0.0
    %133 = vmatpush1.msra.mxu0 %v93
    %134 = vmatprep.subr.mxu0 0.0
    %135 = vmatpush2.msra.mxu0 0.0
    %136 = vmatprep.subr.mxu0 0.0
    %137 = vmatpush2.msra.mxu0 0.0
    %138 = vmatprep.subr.mxu0 0.0
    %139 = vmatpush2.msra.mxu0 0.0
    %140 = vmatprep.subr.mxu0 0.0
    %141 = vmatpush2.msra.mxu0 0.0
    %142 = vmatprep.subr.mxu0 0.0
    %143 = vmatpush2.msra.mxu0 0.0
    %144 = vmatprep.subr.mxu0 0.0
    %145 = vmatpush2.msra.mxu0 0.0
    %146 = vmatprep.subr.mxu0 0.0
    %147 = vmatpush2.msra.mxu0 0.0
    %148 = vmatprep.subr.mxu0 0.0
    %149 = vmatpush2.msra.mxu0 0.0
    %150 = vmatprep.subr.mxu0 0.0
    %151 = vmatpush2.msra.mxu0 0.0
    %152 = vmatprep.subr.mxu0 0.0
    %153 = vmatpush2.msra.mxu0 0.0
    %154 = vmatprep.subr.mxu0 0.0
    %155 = vmatpush2.msra.mxu0 0.0
    %156 = vmatprep.subr.mxu0 0.0
    %157 = vmatpush2.msra.mxu0 0.0
    %158 = vmatprep.subr.mxu0 0.0
    %159 = vmatpush2.msra.mxu0 0.0
    %160 = vmatprep.subr.mxu0 0.0
    %161 = vmatpush2.msra.mxu0 0.0
    %162 = vmatprep.subr.mxu0 0.0
    %163 = vmatpush2.msra.mxu0 0.0
    %164 = vmatprep.subr.mxu0 0.0
    %165 = vmatpush2.msra.mxu0 0.0
    %166 = vmatprep.mubr.f32.mxu0 0.0
    %167 = vmatmul.mubr.f32.gmra.mxu0 %v97
    %v168 = vpop.f32.mrf.mxu0
    %v169 = vadd.f32 0.0, %v168
    %v170 = vpop.f32.mrf.mxu0
    %171 = vmatprep.mubr.f32.mxu0 0.0
    %172 = vmatmul.mubr.f32.gmra.mxu0 %v100
    %v173 = vpop.f32.mrf.mxu0
    %v174 = vadd.f32 0.0, %v173
    %v175 = vpop.f32.mrf.mxu0
    %176 = vdwg.mxu0
    %v177 = vld [vmem:[#allocation3] sm:$0xff]
    %v178 = vld [vmem:[#allocation3 + $0x8] sm:$0xff]
    %v179 = vld [vmem:[#allocation3 + $0x10] sm:$0xff]
    %v180 = vld [vmem:[#allocation3 + $0x18] sm:$0xff]
    %v181 = vld [vmem:[%s4] sm:$0x1]
    %v183 = vlaneseq
    %v184 = vshrl.u32 %v183, 7
    %v185 = vsub.s32 0, %v184
    %v186 = vrot.slane %v181, %v185
    %vm188 = vcmask 261120
    %v190 = vsel %vm188, %v169, 0
    %v193 = vsel %vm188, %v174, 0
    %195 = vmatprep.subr.mxu0 0.0
    %196 = vmatpush1.msra.mxu0 0.0
    %197 = vmatprep.subr.mxu0 0.0
    %198 = vmatpush1.msra.mxu0 0.0
    %199 = vmatprep.subr.mxu0 0.0
    %200 = vmatpush1.msra.mxu0 0.0
    %201 = vmatprep.subr.mxu0 0.0
    %202 = vmatpush1.msra.mxu0 0.0
    %203 = vmatprep.subr.mxu0 0.0
    %204 = vmatpush1.msra.mxu0 0.0
    %205 = vmatprep.subr.mxu0 0.0
    %206 = vmatpush1.msra.mxu0 0.0
    %207 = vmatprep.subr.mxu0 0.0
    %208 = vmatpush1.msra.mxu0 0.0
    %209 = vmatprep.subr.mxu0 0.0
    %210 = vmatpush1.msra.mxu0 0.0
    %211 = vmatprep.subr.mxu0 0.0
    %212 = vmatpush1.msra.mxu0 0.0
    %213 = vmatprep.subr.mxu0 0.0
    %214 = vmatpush1.msra.mxu0 0.0
    %215 = vmatprep.subr.mxu0 0.0
    %216 = vmatpush1.msra.mxu0 0.0
    %217 = vmatprep.subr.mxu0 0.0
    %218 = vmatpush1.msra.mxu0 0.0
    %219 = vmatprep.subr.mxu0 0.0
    %220 = vmatpush1.msra.mxu0 %v180
    %221 = vmatprep.subr.mxu0 0.0
    %222 = vmatpush1.msra.mxu0 %v179
    %223 = vmatprep.subr.mxu0 0.0
    %224 = vmatpush1.msra.mxu0 %v178
    %225 = vmatprep.subr.mxu0 0.0
    %226 = vmatpush1.msra.mxu0 %v177
    %227 = vmatprep.subr.mxu0 0.0
    %228 = vmatpush2.msra.mxu0 0.0
    %229 = vmatprep.subr.mxu0 0.0
    %230 = vmatpush2.msra.mxu0 0.0
    %231 = vmatprep.subr.mxu0 0.0
    %232 = vmatpush2.msra.mxu0 0.0
    %233 = vmatprep.subr.mxu0 0.0
    %234 = vmatpush2.msra.mxu0 0.0
    %235 = vmatprep.subr.mxu0 0.0
    %236 = vmatpush2.msra.mxu0 0.0
    %237 = vmatprep.subr.mxu0 0.0
    %238 = vmatpush2.msra.mxu0 0.0
    %239 = vmatprep.subr.mxu0 0.0
    %240 = vmatpush2.msra.mxu0 0.0
    %241 = vmatprep.subr.mxu0 0.0
    %242 = vmatpush2.msra.mxu0 0.0
    %243 = vmatprep.subr.mxu0 0.0
    %244 = vmatpush2.msra.mxu0 0.0
    %245 = vmatprep.subr.mxu0 0.0
    %246 = vmatpush2.msra.mxu0 0.0
    %247 = vmatprep.subr.mxu0 0.0
    %248 = vmatpush2.msra.mxu0 0.0
    %249 = vmatprep.subr.mxu0 0.0
    %250 = vmatpush2.msra.mxu0 0.0
    %251 = vmatprep.subr.mxu0 0.0
    %252 = vmatpush2.msra.mxu0 0.0
    %253 = vmatprep.subr.mxu0 0.0
    %254 = vmatpush2.msra.mxu0 0.0
    %255 = vmatprep.subr.mxu0 0.0
    %256 = vmatpush2.msra.mxu0 0.0
    %257 = vmatprep.subr.mxu0 0.0
    %258 = vmatpush2.msra.mxu0 0.0
    %259 = vmatprep.mubr.f32.mxu0 0.0
    %260 = vmatmul.mubr.f32.gmra.mxu0 %v190
    %v261 = vpop.f32.mrf.mxu0
    %v262 = vadd.f32 %v186, %v261
    %v263 = vpop.f32.mrf.mxu0
    %264 = vmatprep.mubr.f32.mxu0 0.0
    %265 = vmatmul.mubr.f32.gmra.mxu0 %v193
    %v266 = vpop.f32.mrf.mxu0
    %v267 = vadd.f32 %v186, %v266
    %v268 = vpop.f32.mrf.mxu0
    %269 = vdwg.mxu0
    %v270 = vmax.f32 %v262, 0.0
    %v271 = vmax.f32 %v267, 0.0
    %v272 = vld [vmem:[#allocation5] sm:$0xff]
    %v273 = vld [vmem:[#allocation5 + $0x8] sm:$0xff]
    %v274 = vld [vmem:[#allocation5 + $0x10] sm:$0xff]
    %v275 = vld [vmem:[#allocation5 + $0x18] sm:$0xff]
    %v276 = vld [vmem:[#allocation5 + $0x20] sm:$0xff]
    %v277 = vld [vmem:[#allocation5 + $0x28] sm:$0xff]
    %v278 = vld [vmem:[#allocation5 + $0x30] sm:$0xff]
    %v279 = vld [vmem:[#allocation5 + $0x38] sm:$0xff]
    %v280 = vld [vmem:[%s6] sm:$0x1]
    %v282 = vlaneseq
    %v283 = vshrl.u32 %v282, 7
    %v284 = vsub.s32 0, %v283
    %v285 = vrot.slane %v280, %v284
    %vm287 = vcmask 523264
    %v289 = vsel %vm287, %v270, 0
    %v292 = vsel %vm287, %v271, 0
    %294 = vmatprep.subr.mxu0 0.0
    %295 = vmatpush1.msra.mxu0 0.0
    %296 = vmatprep.subr.mxu0 0.0
    %297 = vmatpush1.msra.mxu0 0.0
    %298 = vmatprep.subr.mxu0 0.0
    %299 = vmatpush1.msra.mxu0 0.0
    %300 = vmatprep.subr.mxu0 0.0
    %301 = vmatpush1.msra.mxu0 0.0
    %302 = vmatprep.subr.mxu0 0.0
    %303 = vmatpush1.msra.mxu0 0.0
    %304 = vmatprep.subr.mxu0 0.0
    %305 = vmatpush1.msra.mxu0 0.0
    %306 = vmatprep.subr.mxu0 0.0
    %307 = vmatpush1.msra.mxu0 0.0
    %308 = vmatprep.subr.mxu0 0.0
    %309 = vmatpush1.msra.mxu0 0.0
    %310 = vmatprep.subr.mxu0 0.0
    %311 = vmatpush1.msra.mxu0 %v279
    %312 = vmatprep.subr.mxu0 0.0
    %313 = vmatpush1.msra.mxu0 %v278
    %314 = vmatprep.subr.mxu0 0.0
    %315 = vmatpush1.msra.mxu0 %v277
    %316 = vmatprep.subr.mxu0 0.0
    %317 = vmatpush1.msra.mxu0 %v276
    %318 = vmatprep.subr.mxu0 0.0
    %319 = vmatpush1.msra.mxu0 %v275
    %320 = vmatprep.subr.mxu0 0.0
    %321 = vmatpush1.msra.mxu0 %v274
    %322 = vmatprep.subr.mxu0 0.0
    %323 = vmatpush1.msra.mxu0 %v273
    %324 = vmatprep.subr.mxu0 0.0
    %325 = vmatpush1.msra.mxu0 %v272
    %326 = vmatprep.subr.mxu0 0.0
    %327 = vmatpush2.msra.mxu0 0.0
    %328 = vmatprep.subr.mxu0 0.0
    %329 = vmatpush2.msra.mxu0 0.0
    %330 = vmatprep.subr.mxu0 0.0
    %331 = vmatpush2.msra.mxu0 0.0
    %332 = vmatprep.subr.mxu0 0.0
    %333 = vmatpush2.msra.mxu0 0.0
    %334 = vmatprep.subr.mxu0 0.0
    %335 = vmatpush2.msra.mxu0 0.0
    %336 = vmatprep.subr.mxu0 0.0
    %337 = vmatpush2.msra.mxu0 0.0
    %338 = vmatprep.subr.mxu0 0.0
    %339 = vmatpush2.msra.mxu0 0.0
    %340 = vmatprep.subr.mxu0 0.0
    %341 = vmatpush2.msra.mxu0 0.0
    %342 = vmatprep.subr.mxu0 0.0
    %343 = vmatpush2.msra.mxu0 0.0
    %344 = vmatprep.subr.mxu0 0.0
    %345 = vmatpush2.msra.mxu0 0.0
    %346 = vmatprep.subr.mxu0 0.0
    %347 = vmatpush2.msra.mxu0 0.0
    %348 = vmatprep.subr.mxu0 0.0
    %349 = vmatpush2.msra.mxu0 0.0
    %350 = vmatprep.subr.mxu0 0.0
    %351 = vmatpush2.msra.mxu0 0.0
    %352 = vmatprep.subr.mxu0 0.0
    %353 = vmatpush2.msra.mxu0 0.0
    %354 = vmatprep.subr.mxu0 0.0
    %355 = vmatpush2.msra.mxu0 0.0
    %356 = vmatprep.subr.mxu0 0.0
    %357 = vmatpush2.msra.mxu0 0.0
    %358 = vmatprep.mubr.f32.mxu0 0.0
    %359 = vmatmul.mubr.f32.gmra.mxu0 %v289
    %v360 = vpop.f32.mrf.mxu0
    %v361 = vadd.f32 %v285, %v360
    %v362 = vpop.f32.mrf.mxu0
    %363 = vmatprep.mubr.f32.mxu0 0.0
    %364 = vmatmul.mubr.f32.gmra.mxu0 %v292
    %v365 = vpop.f32.mrf.mxu0
    %v366 = vadd.f32 %v285, %v365
    %v367 = vpop.f32.mrf.mxu0
    %368 = vdwg.mxu0
    %v369 = vtanh.pop %v361
    %v370 = vtanh.pop %v366
    %371 = vst.msk [vmem:[%s11] sm:$0xff] %vm287, %v369
    %372 = vst.msk [vmem:[%s11 + $0x8] sm:$0xff] %vm287, %v370
    %s373 = sld [smem:[#allocation2]]
    %v374 = vld [vmem:[#allocation7] sm:$0xff]
    %v375 = vld [vmem:[#allocation7 + $0x8] sm:$0xff]
    %v376 = vld [vmem:[%s9] sm:$0x1]
    %v377 = vld [vmem:[%s8] sm:$0x1]
    %v378 = vstv %s373
    %v379 = vmul.f32 %v378, %v377
    %v380 = vadd.f32 %v376, %v379
    %v382 = vlaneseq
    %v383 = vshrl.u32 %v382, 7
    %v384 = vsub.s32 0, %v383
    %v385 = vrot.slane %v380, %v384
    %v388 = vsel %vm95, %v369, 0
    %v391 = vsel %vm95, %v370, 0
    %393 = vmatprep.subr.mxu0 0.0
    %394 = vmatpush1.msra.mxu0 0.0
    %395 = vmatprep.subr.mxu0 0.0
    %396 = vmatpush1.msra.mxu0 0.0
    %397 = vmatprep.subr.mxu0 0.0
    %398 = vmatpush1.msra.mxu0 0.0
    %399 = vmatprep.subr.mxu0 0.0
    %400 = vmatpush1.msra.mxu0 0.0
    %401 = vmatprep.subr.mxu0 0.0
    %402 = vmatpush1.msra.mxu0 0.0
    %403 = vmatprep.subr.mxu0 0.0
    %404 = vmatpush1.msra.mxu0 0.0
    %405 = vmatprep.subr.mxu0 0.0
    %406 = vmatpush1.msra.mxu0 0.0
    %407 = vmatprep.subr.mxu0 0.0
    %408 = vmatpush1.msra.mxu0 0.0
    %409 = vmatprep.subr.mxu0 0.0
    %410 = vmatpush1.msra.mxu0 0.0
    %411 = vmatprep.subr.mxu0 0.0
    %412 = vmatpush1.msra.mxu0 0.0
    %413 = vmatprep.subr.mxu0 0.0
    %414 = vmatpush1.msra.mxu0 0.0
    %415 = vmatprep.subr.mxu0 0.0
    %416 = vmatpush1.msra.mxu0 0.0
    %417 = vmatprep.subr.mxu0 0.0
    %418 = vmatpush1.msra.mxu0 0.0
    %419 = vmatprep.subr.mxu0 0.0
    %420 = vmatpush1.msra.mxu0 0.0
    %421 = vmatprep.subr.mxu0 0.0
    %422 = vmatpush1.msra.mxu0 %v375
    %423 = vmatprep.subr.mxu0 0.0
    %424 = vmatpush1.msra.mxu0 %v374
    %425 = vmatprep.subr.mxu0 0.0
    %426 = vmatpush2.msra.mxu0 0.0
    %427 = vmatprep.subr.mxu0 0.0
    %428 = vmatpush2.msra.mxu0 0.0
    %429 = vmatprep.subr.mxu0 0.0
    %430 = vmatpush2.msra.mxu0 0.0
    %431 = vmatprep.subr.mxu0 0.0
    %432 = vmatpush2.msra.mxu0 0.0
    %433 = vmatprep.subr.mxu0 0.0
    %434 = vmatpush2.msra.mxu0 0.0
    %435 = vmatprep.subr.mxu0 0.0
    %436 = vmatpush2.msra.mxu0 0.0
    %437 = vmatprep.subr.mxu0 0.0
    %438 = vmatpush2.msra.mxu0 0.0
    %439 = vmatprep.subr.mxu0 0.0
    %440 = vmatpush2.msra.mxu0 0.0
    %441 = vmatprep.subr.mxu0 0.0
    %442 = vmatpush2.msra.mxu0 0.0
    %443 = vmatprep.subr.mxu0 0.0
    %444 = vmatpush2.msra.mxu0 0.0
    %445 = vmatprep.subr.mxu0 0.0
    %446 = vmatpush2.msra.mxu0 0.0
    %447 = vmatprep.subr.mxu0 0.0
    %448 = vmatpush2.msra.mxu0 0.0
    %449 = vmatprep.subr.mxu0 0.0
    %450 = vmatpush2.msra.mxu0 0.0
    %451 = vmatprep.subr.mxu0 0.0
    %452 = vmatpush2.msra.mxu0 0.0
    %453 = vmatprep.subr.mxu0 0.0
    %454 = vmatpush2.msra.mxu0 0.0
    %455 = vmatprep.subr.mxu0 0.0
    %456 = vmatpush2.msra.mxu0 0.0
    %457 = vmatprep.mubr.f32.mxu0 0.0
    %458 = vmatmul.mubr.f32.gmra.mxu0 %v388
    %v459 = vpop.f32.mrf.mxu0
    %v460 = vadd.f32 %v385, %v459
    %v461 = vpop.f32.mrf.mxu0
    %462 = vmatprep.mubr.f32.mxu0 0.0
    %463 = vmatmul.mubr.f32.gmra.mxu0 %v391
    %v464 = vpop.f32.mrf.mxu0
    %v465 = vadd.f32 %v385, %v464
    %v466 = vpop.f32.mrf.mxu0
    %467 = vdwg.mxu0
    %v468 = vsel %vm95, %v460, -inf
    %469 = vmax.xlane.f32.xlu0 %v468
    %v470 = vpop.xlane.xlu0 %469
    %v471 = vsel %vm95, %v465, -inf
    %472 = vmax.xlane.f32.xlu0 %v471
    %v473 = vpop.xlane.xlu0 %472
    %v474 = vsub.f32 %v460, %v470
    %v475 = vsub.f32 %v465, %v473
    %v476 = vmul.f32 %v474, 1.442695
    %v477 = vpow.pop %v476
    %v478 = vmul.f32 %v475, 1.442695
    %v479 = vpow.pop %v478
    %v480 = vsel %vm95, %v477, 0.0
    %481 = vadd.xlane.f32.xlu0 %v480
    %v482 = vpop.xlane.xlu0 %481
    %v483 = vsel %vm95, %v479, 0.0
    %484 = vadd.xlane.f32.xlu0 %v483
    %v485 = vpop.xlane.xlu0 %484
    %v486 = vlog2.pop %v482
    %v487 = vmul.f32 %v486, 0.6931472
    %v488 = vlog2.pop %v485
    %v489 = vmul.f32 %v488, 0.6931472
    %v490 = vsub.f32 %v474, %v487
    %v491 = vsub.f32 %v475, %v489
    %492 = vst.msk [vmem:[%s10] sm:$0xff] %vm95, %v490
    %493 = vst.msk [vmem:[%s10 + $0x8] sm:$0xff] %vm95, %v491
    %494 = vrot.lane.b32.xlu0 %v369, 112
    %v495 = vpop.permute.xlu0 %494
    %496 = vrot.lane.b32.xlu0 %v370, 112
    %v497 = vpop.permute.xlu0 %496
    %v498 = vsel %vm95, %v495, 0
    %v500 = vsel %vm95, %v497, 0
    %502 = vmatprep.subr.mxu0 0.0
    %503 = vmatpush1.msra.mxu0 0.0
    %504 = vmatprep.subr.mxu0 0.0
    %505 = vmatpush1.msra.mxu0 0.0
    %506 = vmatprep.subr.mxu0 0.0
    %507 = vmatpush1.msra.mxu0 0.0
    %508 = vmatprep.subr.mxu0 0.0
    %509 = vmatpush1.msra.mxu0 0.0
    %510 = vmatprep.subr.mxu0 0.0
    %511 = vmatpush1.msra.mxu0 0.0
    %512 = vmatprep.subr.mxu0 0.0
    %513 = vmatpush1.msra.mxu0 0.0
    %514 = vmatprep.subr.mxu0 0.0
    %515 = vmatpush1.msra.mxu0 0.0
    %516 = vmatprep.subr.mxu0 0.0
    %517 = vmatpush1.msra.mxu0 0.0
    %518 = vmatprep.subr.mxu0 0.0
    %519 = vmatpush1.msra.mxu0 0.0
    %520 = vmatprep.subr.mxu0 0.0
    %521 = vmatpush1.msra.mxu0 0.0
    %522 = vmatprep.subr.mxu0 0.0
    %523 = vmatpush1.msra.mxu0 0.0
    %524 = vmatprep.subr.mxu0 0.0
    %525 = vmatpush1.msra.mxu0 0.0
    %526 = vmatprep.subr.mxu0 0.0
    %527 = vmatpush1.msra.mxu0 0.0
    %528 = vmatprep.subr.mxu0 0.0
    %529 = vmatpush1.msra.mxu0 0.0
    %530 = vmatprep.subr.mxu0 0.0
    %531 = vmatpush1.msra.mxu0 %v375
    %532 = vmatprep.subr.mxu0 0.0
    %533 = vmatpush1.msra.mxu0 %v374
    %534 = vmatprep.subr.mxu0 0.0
    %535 = vmatpush2.msra.mxu0 0.0
    %536 = vmatprep.subr.mxu0 0.0
    %537 = vmatpush2.msra.mxu0 0.0
    %538 = vmatprep.subr.mxu0 0.0
    %539 = vmatpush2.msra.mxu0 0.0
    %540 = vmatprep.subr.mxu0 0.0
    %541 = vmatpush2.msra.mxu0 0.0
    %542 = vmatprep.subr.mxu0 0.0
    %543 = vmatpush2.msra.mxu0 0.0
    %544 = vmatprep.subr.mxu0 0.0
    %545 = vmatpush2.msra.mxu0 0.0
    %546 = vmatprep.subr.mxu0 0.0
    %547 = vmatpush2.msra.mxu0 0.0
    %548 = vmatprep.subr.mxu0 0.0
    %549 = vmatpush2.msra.mxu0 0.0
    %550 = vmatprep.subr.mxu0 0.0
    %551 = vmatpush2.msra.mxu0 0.0
    %552 = vmatprep.subr.mxu0 0.0
    %553 = vmatpush2.msra.mxu0 0.0
    %554 = vmatprep.subr.mxu0 0.0
    %555 = vmatpush2.msra.mxu0 0.0
    %556 = vmatprep.subr.mxu0 0.0
    %557 = vmatpush2.msra.mxu0 0.0
    %558 = vmatprep.subr.mxu0 0.0
    %559 = vmatpush2.msra.mxu0 0.0
    %560 = vmatprep.subr.mxu0 0.0
    %561 = vmatpush2.msra.mxu0 0.0
    %562 = vmatprep.subr.mxu0 0.0
    %563 = vmatpush2.msra.mxu0 0.0
    %564 = vmatprep.subr.mxu0 0.0
    %565 = vmatpush2.msra.mxu0 0.0
    %566 = vmatprep.mubr.f32.mxu0 0.0
    %567 = vmatmul.mubr.f32.gmra.mxu0 %v498
    %v568 = vpop.f32.mrf.mxu0
    %v569 = vadd.f32 %v385, %v568
    %v570 = vpop.f32.mrf.mxu0
    %571 = vmatprep.mubr.f32.mxu0 0.0
    %572 = vmatmul.mubr.f32.gmra.mxu0 %v500
    %v573 = vpop.f32.mrf.mxu0
    %v574 = vadd.f32 %v385, %v573
    %v575 = vpop.f32.mrf.mxu0
    %576 = vdwg.mxu0
    %v577 = vsel %vm95, %v569, -inf
    %578 = vmax.xlane.f32.xlu0 %v577
    %v579 = vpop.xlane.xlu0 %578
    %v580 = vsel %vm95, %v574, -inf
    %581 = vmax.xlane.f32.xlu0 %v580
    %v582 = vpop.xlane.xlu0 %581
    %v583 = vsub.f32 %v569, %v579
    %v584 = vsub.f32 %v574, %v582
    %v585 = vmul.f32 %v583, 1.442695
    %v586 = vpow.pop %v585
    %v587 = vmul.f32 %v584, 1.442695
    %v588 = vpow.pop %v587
    %v589 = vsel %vm95, %v586, 0.0
    %590 = vadd.xlane.f32.xlu0 %v589
    %v591 = vpop.xlane.xlu0 %590
    %v592 = vsel %vm95, %v588, 0.0
    %593 = vadd.xlane.f32.xlu0 %v592
    %v594 = vpop.xlane.xlu0 %593
    %v595 = vlog2.pop %v591
    %v596 = vmul.f32 %v595, 0.6931472
    %v597 = vlog2.pop %v594
    %v598 = vmul.f32 %v597, 0.6931472
    %v599 = vsub.f32 %v583, %v596
    %v600 = vsub.f32 %v584, %v598
    %601 = vst.msk [vmem:[%s10 + $0x10] sm:$0xff] %vm95, %v599
    %602 = vst.msk [vmem:[%s10 + $0x18] sm:$0xff] %vm95, %v600
    %603 = vrot.lane.b32.xlu0 %v369, 96
    %v604 = vpop.permute.xlu0 %603
    %605 = vrot.lane.b32.xlu0 %v370, 96
    %v606 = vpop.permute.xlu0 %605
    %v607 = vsel %vm95, %v604, 0
    %v609 = vsel %vm95, %v606, 0
    %611 = vmatprep.subr.mxu0 0.0
    %612 = vmatpush1.msra.mxu0 0.0
    %613 = vmatprep.subr.mxu0 0.0
    %614 = vmatpush1.msra.mxu0 0.0
    %615 = vmatprep.subr.mxu0 0.0
    %616 = vmatpush1.msra.mxu0 0.0
    %617 = vmatprep.subr.mxu0 0.0
    %618 = vmatpush1.msra.mxu0 0.0
    %619 = vmatprep.subr.mxu0 0.0
    %620 = vmatpush1.msra.mxu0 0.0
    %621 = vmatprep.subr.mxu0 0.0
    %622 = vmatpush1.msra.mxu0 0.0
    %623 = vmatprep.subr.mxu0 0.0
    %624 = vmatpush1.msra.mxu0 0.0
    %625 = vmatprep.subr.mxu0 0.0
    %626 = vmatpush1.msra.mxu0 0.0
    %627 = vmatprep.subr.mxu0 0.0
    %628 = vmatpush1.msra.mxu0 0.0
    %629 = vmatprep.subr.mxu0 0.0
    %630 = vmatpush1.msra.mxu0 0.0
    %631 = vmatprep.subr.mxu0 0.0
    %632 = vmatpush1.msra.mxu0 0.0
    %633 = vmatprep.subr.mxu0 0.0
    %634 = vmatpush1.msra.mxu0 0.0
    %635 = vmatprep.subr.mxu0 0.0
    %636 = vmatpush1.msra.mxu0 0.0
    %637 = vmatprep.subr.mxu0 0.0
    %638 = vmatpush1.msra.mxu0 0.0
    %639 = vmatprep.subr.mxu0 0.0
    %640 = vmatpush1.msra.mxu0 %v375
    %641 = vmatprep.subr.mxu0 0.0
    %642 = vmatpush1.msra.mxu0 %v374
    %643 = vmatprep.subr.mxu0 0.0
    %644 = vmatpush2.msra.mxu0 0.0
    %645 = vmatprep.subr.mxu0 0.0
    %646 = vmatpush2.msra.mxu0 0.0
    %647 = vmatprep.subr.mxu0 0.0
    %648 = vmatpush2.msra.mxu0 0.0
    %649 = vmatprep.subr.mxu0 0.0
    %650 = vmatpush2.msra.mxu0 0.0
    %651 = vmatprep.subr.mxu0 0.0
    %652 = vmatpush2.msra.mxu0 0.0
    %653 = vmatprep.subr.mxu0 0.0
    %654 = vmatpush2.msra.mxu0 0.0
    %655 = vmatprep.subr.mxu0 0.0
    %656 = vmatpush2.msra.mxu0 0.0
    %657 = vmatprep.subr.mxu0 0.0
    %658 = vmatpush2.msra.mxu0 0.0
    %659 = vmatprep.subr.mxu0 0.0
    %660 = vmatpush2.msra.mxu0 0.0
    %661 = vmatprep.subr.mxu0 0.0
    %662 = vmatpush2.msra.mxu0 0.0
    %663 = vmatprep.subr.mxu0 0.0
    %664 = vmatpush2.msra.mxu0 0.0
    %665 = vmatprep.subr.mxu0 0.0
    %666 = vmatpush2.msra.mxu0 0.0
    %667 = vmatprep.subr.mxu0 0.0
    %668 = vmatpush2.msra.mxu0 0.0
    %669 = vmatprep.subr.mxu0 0.0
    %670 = vmatpush2.msra.mxu0 0.0
    %671 = vmatprep.subr.mxu0 0.0
    %672 = vmatpush2.msra.mxu0 0.0
    %673 = vmatprep.subr.mxu0 0.0
    %674 = vmatpush2.msra.mxu0 0.0
    %675 = vmatprep.mubr.f32.mxu0 0.0
    %676 = vmatmul.mubr.f32.gmra.mxu0 %v607
    %v677 = vpop.f32.mrf.mxu0
    %v678 = vadd.f32 %v385, %v677
    %v679 = vpop.f32.mrf.mxu0
    %680 = vmatprep.mubr.f32.mxu0 0.0
    %681 = vmatmul.mubr.f32.gmra.mxu0 %v609
    %v682 = vpop.f32.mrf.mxu0
    %v683 = vadd.f32 %v385, %v682
    %v684 = vpop.f32.mrf.mxu0
    %685 = vdwg.mxu0
    %v686 = vsel %vm95, %v678, -inf
    %687 = vmax.xlane.f32.xlu0 %v686
    %v688 = vpop.xlane.xlu0 %687
    %v689 = vsel %vm95, %v683, -inf
    %690 = vmax.xlane.f32.xlu0 %v689
    %v691 = vpop.xlane.xlu0 %690
    %v692 = vsub.f32 %v678, %v688
    %v693 = vsub.f32 %v683, %v691
    %v694 = vmul.f32 %v692, 1.442695
    %v695 = vpow.pop %v694
    %v696 = vmul.f32 %v693, 1.442695
    %v697 = vpow.pop %v696
    %v698 = vsel %vm95, %v695, 0.0
    %699 = vadd.xlane.f32.xlu0 %v698
    %v700 = vpop.xlane.xlu0 %699
    %v701 = vsel %vm95, %v697, 0.0
    %702 = vadd.xlane.f32.xlu0 %v701
    %v703 = vpop.xlane.xlu0 %702
    %v704 = vlog2.pop %v700
    %v705 = vmul.f32 %v704, 0.6931472
    %v706 = vlog2.pop %v703
    %v707 = vmul.f32 %v706, 0.6931472
    %v708 = vsub.f32 %v692, %v705
    %v709 = vsub.f32 %v693, %v707
    %710 = vst.msk [vmem:[%s10 + $0x20] sm:$0xff] %vm95, %v708
    %711 = vst.msk [vmem:[%s10 + $0x28] sm:$0xff] %vm95, %v709
    %712 = vrot.lane.b32.xlu0 %v369, 80
    %v713 = vpop.permute.xlu0 %712
    %714 = vrot.lane.b32.xlu0 %v370, 80
    %v715 = vpop.permute.xlu0 %714
    %v716 = vsel %vm95, %v713, 0
    %v718 = vsel %vm95, %v715, 0
    %720 = vmatprep.subr.mxu0 0.0
    %721 = vmatpush1.msra.mxu0 0.0
    %722 = vmatprep.subr.mxu0 0.0
    %723 = vmatpush1.msra.mxu0 0.0
    %724 = vmatprep.subr.mxu0 0.0
    %725 = vmatpush1.msra.mxu0 0.0
    %726 = vmatprep.subr.mxu0 0.0
    %727 = vmatpush1.msra.mxu0 0.0
    %728 = vmatprep.subr.mxu0 0.0
    %729 = vmatpush1.msra.mxu0 0.0
    %730 = vmatprep.subr.mxu0 0.0
    %731 = vmatpush1.msra.mxu0 0.0
    %732 = vmatprep.subr.mxu0 0.0
    %733 = vmatpush1.msra.mxu0 0.0
    %734 = vmatprep.subr.mxu0 0.0
    %735 = vmatpush1.msra.mxu0 0.0
    %736 = vmatprep.subr.mxu0 0.0
    %737 = vmatpush1.msra.mxu0 0.0
    %738 = vmatprep.subr.mxu0 0.0
    %739 = vmatpush1.msra.mxu0 0.0
    %740 = vmatprep.subr.mxu0 0.0
    %741 = vmatpush1.msra.mxu0 0.0
    %742 = vmatprep.subr.mxu0 0.0
    %743 = vmatpush1.msra.mxu0 0.0
    %744 = vmatprep.subr.mxu0 0.0
    %745 = vmatpush1.msra.mxu0 0.0
    %746 = vmatprep.subr.mxu0 0.0
    %747 = vmatpush1.msra.mxu0 0.0
    %748 = vmatprep.subr.mxu0 0.0
    %749 = vmatpush1.msra.mxu0 %v375
    %750 = vmatprep.subr.mxu0 0.0
    %751 = vmatpush1.msra.mxu0 %v374
    %752 = vmatprep.subr.mxu0 0.0
    %753 = vmatpush2.msra.mxu0 0.0
    %754 = vmatprep.subr.mxu0 0.0
    %755 = vmatpush2.msra.mxu0 0.0
    %756 = vmatprep.subr.mxu0 0.0
    %757 = vmatpush2.msra.mxu0 0.0
    %758 = vmatprep.subr.mxu0 0.0
    %759 = vmatpush2.msra.mxu0 0.0
    %760 = vmatprep.subr.mxu0 0.0
    %761 = vmatpush2.msra.mxu0 0.0
    %762 = vmatprep.subr.mxu0 0.0
    %763 = vmatpush2.msra.mxu0 0.0
    %764 = vmatprep.subr.mxu0 0.0
    %765 = vmatpush2.msra.mxu0 0.0
    %766 = vmatprep.subr.mxu0 0.0
    %767 = vmatpush2.msra.mxu0 0.0
    %768 = vmatprep.subr.mxu0 0.0
    %769 = vmatpush2.msra.mxu0 0.0
    %770 = vmatprep.subr.mxu0 0.0
    %771 = vmatpush2.msra.mxu0 0.0
    %772 = vmatprep.subr.mxu0 0.0
    %773 = vmatpush2.msra.mxu0 0.0
    %774 = vmatprep.subr.mxu0 0.0
    %775 = vmatpush2.msra.mxu0 0.0
    %776 = vmatprep.subr.mxu0 0.0
    %777 = vmatpush2.msra.mxu0 0.0
    %778 = vmatprep.subr.mxu0 0.0
    %779 = vmatpush2.msra.mxu0 0.0
    %780 = vmatprep.subr.mxu0 0.0
    %781 = vmatpush2.msra.mxu0 0.0
    %782 = vmatprep.subr.mxu0 0.0
    %783 = vmatpush2.msra.mxu0 0.0
    %784 = vmatprep.mubr.f32.mxu0 0.0
    %785 = vmatmul.mubr.f32.gmra.mxu0 %v716
    %v786 = vpop.f32.mrf.mxu0
    %v787 = vadd.f32 %v385, %v786
    %v788 = vpop.f32.mrf.mxu0
    %789 = vmatprep.mubr.f32.mxu0 0.0
    %790 = vmatmul.mubr.f32.gmra.mxu0 %v718
    %v791 = vpop.f32.mrf.mxu0
    %v792 = vadd.f32 %v385, %v791
    %v793 = vpop.f32.mrf.mxu0
    %794 = vdwg.mxu0
    %v795 = vsel %vm95, %v787, -inf
    %796 = vmax.xlane.f32.xlu0 %v795
    %v797 = vpop.xlane.xlu0 %796
    %v798 = vsel %vm95, %v792, -inf
    %799 = vmax.xlane.f32.xlu0 %v798
    %v800 = vpop.xlane.xlu0 %799
    %v801 = vsub.f32 %v787, %v797
    %v802 = vsub.f32 %v792, %v800
    %v803 = vmul.f32 %v801, 1.442695
    %v804 = vpow.pop %v803
    %v805 = vmul.f32 %v802, 1.442695
    %v806 = vpow.pop %v805
    %v807 = vsel %vm95, %v804, 0.0
    %808 = vadd.xlane.f32.xlu0 %v807
    %v809 = vpop.xlane.xlu0 %808
    %v810 = vsel %vm95, %v806, 0.0
    %811 = vadd.xlane.f32.xlu0 %v810
    %v812 = vpop.xlane.xlu0 %811
    %v813 = vlog2.pop %v809
    %v814 = vmul.f32 %v813, 0.6931472
    %v815 = vlog2.pop %v812
    %v816 = vmul.f32 %v815, 0.6931472
    %v817 = vsub.f32 %v801, %v814
    %v818 = vsub.f32 %v802, %v816
    %819 = vst.msk [vmem:[%s10 + $0x30] sm:$0xff] %vm95, %v817
    %820 = vst.msk [vmem:[%s10 + $0x38] sm:$0xff] %vm95, %v818
    // Predicated region
    $region54: #{hw_generator_forward.1} parent=1 // pred_check
      _
    $region55: #{hw_generator_forward.1} parent=1 // pred_check_branch
      %822 = sbr.rel (0) target = $region57
    $region56: #{hw_generator_forward.1} parent=1 // pred_region
      _
    $region57: #{hw_generator_forward.1} parent=1 // pred_fallthru
      _
    // Predicated region
    $region58: #{hw_generator_forward.1} parent=1 // pred_check
      _
    $region59: #{hw_generator_forward.1} parent=1 // pred_check_branch
      %824 = sbr.rel (0) target = $region61
    $region60: #{hw_generator_forward.1} parent=1 // pred_region
      _
    $region61: #{hw_generator_forward.1} parent=1 // pred_fallthru
      _
    // Predicated region
    $region62: #{hw_generator_forward.1} parent=1 // pred_check
      _
    $region63: #{hw_generator_forward.1} parent=1 // pred_check_branch
      %826 = sbr.rel (0) target = $region65
    $region64: #{hw_generator_forward.1} parent=1 // pred_region
      _
    $region65: #{hw_generator_forward.1} parent=1 // pred_fallthru
      _
    // Predicated region
    $region66: #{hw_generator_forward.1} parent=1 // pred_check
      _
    $region67: #{hw_generator_forward.1} parent=1 // pred_check_branch
      %828 = sbr.rel (0) target = $region69
    $region68: #{hw_generator_forward.1} parent=1 // pred_region
      _
    $region69: #{hw_generator_forward.1} parent=1 // pred_fallthru
      _
    %829 = vsyncpa [#allocation4], 1
    %830 = vsyncpa [#allocation6], 1

</llo_original>
